<compile_context>
chip_gen: v7x
topology: tpu7x:2x2x1
jax: 0.10.0
libtpu: 0.0.40
codegen_flags: <defaults>
</compile_context>

<pallas_src>
import functools

import jax
import jax.numpy as jnp
from jax import lax
from jax.experimental import pallas as pl
from jax.experimental.pallas import tpu as pltpu

_LANE = 512                      # lanes per row of the flattened layout (4 * 128)
_ROW_CHUNK = 256                 # rows per inner step: (256, 512) f32 intermediates ~= 0.5 MiB
_TARGET_BLOCK_BYTES = 4 << 20    # ~4 MiB per input block per grid step


def _round_up(x: int, m: int) -> int:
    return (x + m - 1) // m * m


def _bce_block_sum(x_ref, t_ref, *, rows_per_block, chunk_rows, lane, rem):
    """Partial BCE sum of one (rows_per_block, lane) block folded into an (8, 128) vreg.

    `rem` is a *static* Python int = number of valid elements in this block,
    or None meaning "fully valid" (no masking code is emitted at all).
    """
    n_chunks = rows_per_block // chunk_rows
    acc = jnp.zeros((8, lane), jnp.float32)
    for c in range(n_chunks):
        r0 = c * chunk_rows
        x = x_ref[r0:r0 + chunk_rows, :].astype(jnp.float32)
        t = t_ref[r0:r0 + chunk_rows, :].astype(jnp.float32)
        # Stable BCE-with-logits: max(x,0) - x*t + log(1 + exp(-|x|)).
        # TODO(synk): jnp.log1p would be marginally more precise for large |x|;
        # kept as log(1+exp) for guaranteed Mosaic lowering (difference < 1e-7/elem).
        bce = jnp.maximum(x, 0.0) - x * t + jnp.log(1.0 + jnp.exp(-jnp.abs(x)))
        if rem is not None:
            # Block-local flat index -> never overflows int32 even for huge inputs.
            row = lax.broadcasted_iota(jnp.int32, (chunk_rows, lane), 0)
            col = lax.broadcasted_iota(jnp.int32, (chunk_rows, lane), 1)
            local = (r0 + row) * lane + col
            bce = jnp.where(local < rem, bce, 0.0)   # select discards garbage/NaN lanes
        # Fold chunk rows into 8 sublanes with plain VPU adds (sublane-aligned slices).
        folded = bce[0:8, :]
        for r in range(1, chunk_rows // 8):
            folded = folded + bce[r * 8:(r + 1) * 8, :]
        acc = acc + folded
    # Fold 512 lanes -> 128 (three more vreg adds; still no XLU reduction).
    out = acc[:, 0:128]
    for j in range(1, lane // 128):
        out = out + acc[:, j * 128:(j + 1) * 128]
    return out


def _bce_kernel(x_ref, t_ref, out_ref, *, rows_per_block, chunk_rows, lane, rem_last):
    block_sum = functools.partial(
        _bce_block_sum, x_ref, t_ref,
        rows_per_block=rows_per_block, chunk_rows=chunk_rows, lane=lane)

    if rem_last == rows_per_block * lane:
        # Every block (including the last) is completely full: no mask anywhere.
        out_ref[...] = block_sum(rem=None)[None, :, :]
    else:
        last = pl.num_programs(0) - 1

        @pl.when(pl.program_id(0) != last)
        def _():
            out_ref[...] = block_sum(rem=None)[None, :, :]

        @pl.when(pl.program_id(0) == last)
        def _():
            out_ref[...] = block_sum(rem=rem_last)[None, :, :]


def _choose_rows_per_block(rows: int, elem_bytes: int) -> int:
    bt_cap = max(
        _ROW_CHUNK,
        (_TARGET_BLOCK_BYTES // (_LANE * elem_bytes)) // _ROW_CHUNK * _ROW_CHUNK)
    # Aim for >= 2 roughly even blocks (v7x megacore), capped by the VMEM budget.
    n_blocks = max(2, pl.cdiv(rows, bt_cap))
    rpb = pl.cdiv(rows, n_blocks)
    if rpb <= _ROW_CHUNK:
        rpb = _round_up(max(rpb, 8), 8)
    else:
        rpb = min(_round_up(rpb, _ROW_CHUNK), bt_cap)
    return rpb


def binary_ce_loss(inputs: jax.Array, targets: jax.Array) -> jax.Array:
    """Pallas TPU implementation of BinaryCELoss.forward (BCE-with-logits, mean)."""
    assert inputs.shape == targets.shape
    total = int(inputs.size)
    lane = _LANE
    rows = pl.cdiv(total, lane)

    elem_bytes = max(inputs.dtype.itemsize, targets.dtype.itemsize)
    rows_per_block = _choose_rows_per_block(rows, elem_bytes)
    chunk_rows = min(_ROW_CHUNK, rows_per_block)
    num_blocks = pl.cdiv(rows, rows_per_block)
    # Valid elements in the (possibly ragged) last block -- a static Python int.
    rem_last = total - (num_blocks - 1) * rows_per_block * lane

    def _prep(a):
        flat = jnp.reshape(a, (-1,))
        pad = rows * lane - total
        if pad:  # only when total % 512 != 0 (never pads to a block multiple)
            flat = jnp.pad(flat, (0, pad))
        return jnp.reshape(flat, (rows, lane))

    x2 = _prep(inputs)
    t2 = _prep(targets)

    kernel = functools.partial(
        _bce_kernel, rows_per_block=rows_per_block, chunk_rows=chunk_rows,
        lane=lane, rem_last=rem_last)

    bytes_accessed = (inputs.size * inputs.dtype.itemsize
                      + targets.size * targets.dtype.itemsize
                      + num_blocks * 8 * 128 * 4)

    partials = pl.pallas_call(
        kernel,
        out_shape=jax.ShapeDtypeStruct((num_blocks, 8, 128), jnp.float32),
        grid_spec=pltpu.PrefetchScalarGridSpec(
            num_scalar_prefetch=0,
            grid=(num_blocks,),
            in_specs=[
                pl.BlockSpec((rows_per_block, lane), lambda i: (i, 0)),
                pl.BlockSpec((rows_per_block, lane), lambda i: (i, 0)),
            ],
            out_specs=pl.BlockSpec((1, 8, 128), lambda i: (i, 0, 0)),
        ),
        compiler_params=pltpu.CompilerParams(
            # Blocks are independent partial sums -> shard across TCs on v7x.
            dimension_semantics=("parallel",),
            # 2 inputs x 2 pipeline buffers x 4 MiB = 16 MiB + ~2-3 MiB chunk
            # intermediates; 32 MiB fits v5e/v6e/v7x scoped VMEM comfortably.
            vmem_limit_bytes=32 << 20,
        ),
        cost_estimate=pl.CostEstimate(
            flops=7 * total,
            transcendentals=2 * total,
            bytes_accessed=int(bytes_accessed),
        ),
    )(x2, t2)

    # Tiny epilogue in XLA: sum of per-block (8,128) partials, mean over all elements.
    return jnp.sum(partials) / jnp.float32(total)


def binary_ce_loss_ref(inputs, targets):
    x = inputs.astype(jnp.float32)
    t = targets.astype(jnp.float32)
    bce = jnp.maximum(x, 0.0) - x * t + jnp.log(1.0 + jnp.exp(-jnp.abs(x)))
    return jnp.mean(bce)


if __name__ == "__main__":
    key = jax.random.PRNGKey(0)
    k1, k2 = jax.random.split(key)

    B, C, H, W = 2, 4, 16, 16
    inputs = jax.random.normal(k1, (B, C, H, W), dtype=jnp.float32)
    targets = (jax.random.uniform(k2, (B, C, H, W)) > 0.5).astype(jnp.float32)

    loss = jax.block_until_ready(binary_ce_loss(inputs, targets))
    ref = jax.block_until_ready(binary_ce_loss_ref(inputs, targets))

    assert jnp.allclose(loss, ref, atol=1e-5, rtol=1e-5), (loss, ref)
    print("KERNEL_OK")
</pallas_src>

<mosaic_0001>
module attributes {stable_mosaic.version = 11 : i64} {
  func.func @_bce_kernel(%arg0: i32, %arg1: memref<8x512xf32, #tpu.memory_space<vmem>>, %arg2: memref<8x512xf32, #tpu.memory_space<vmem>>, %arg3: memref<1x8x128xf32, #tpu.memory_space<vmem>>) attributes {dimension_semantics = [#tpu.dimension_semantics<parallel>], iteration_bounds = array<i64: 1>, scalar_prefetch = 0 : i64, scratch_operands = 0 : i64, tpu.core_type = #tpu.core_type<tc>, window_params = [{transform_indices = @transform_0, window_bounds = array<i64: 8, 512>}, {transform_indices = @transform_1, window_bounds = array<i64: 8, 512>}, {transform_indices = @transform_2, window_bounds = array<i64: 1, 8, 128>}]} {
    %c0_i32 = arith.constant 0 : i32
    %0 = arith.cmpi ne, %arg0, %c0_i32 : i32
    %1 = arith.extui %0 : i1 to i32
    %c0_i32_0 = arith.constant 0 : i32
    %2 = arith.cmpi ne, %1, %c0_i32_0 : i32
    scf.if %2 {
      %cst = arith.constant 0.000000e+00 : f32
      %6 = vector.broadcast %cst : f32 to vector<8x512xf32>
      %c0 = arith.constant 0 : index
      %c0_3 = arith.constant 0 : index
      %7 = vector.load %arg1[%c0, %c0_3] : memref<8x512xf32, #tpu.memory_space<vmem>>, vector<8x512xf32>
      %c0_4 = arith.constant 0 : index
      %c0_5 = arith.constant 0 : index
      %8 = vector.load %arg2[%c0_4, %c0_5] : memref<8x512xf32, #tpu.memory_space<vmem>>, vector<8x512xf32>
      %cst_6 = arith.constant 0.000000e+00 : f32
      %9 = vector.broadcast %cst_6 : f32 to vector<8x512xf32>
      %10 = arith.maximumf %7, %9 : vector<8x512xf32>
      %11 = arith.mulf %7, %8 : vector<8x512xf32>
      %12 = arith.subf %10, %11 : vector<8x512xf32>
      %13 = math.absf %7 : vector<8x512xf32>
      %cst_7 = arith.constant 0.000000e+00 : f32
      %14 = vector.broadcast %cst_7 : f32 to vector<8x512xf32>
      %15 = arith.subf %14, %13 : vector<8x512xf32>
      %16 = math.exp %15 : vector<8x512xf32>
      %cst_8 = arith.constant 1.000000e+00 : f32
      %17 = vector.broadcast %cst_8 : f32 to vector<8x512xf32>
      %18 = arith.addf %17, %16 : vector<8x512xf32>
      %19 = math.log %18 : vector<8x512xf32>
      %20 = arith.addf %12, %19 : vector<8x512xf32>
      %21 = arith.addf %6, %20 : vector<8x512xf32>
      %22 = vector.extract_strided_slice %21 {offsets = [0, 0], sizes = [8, 128], strides = [1, 1]} : vector<8x512xf32> to vector<8x128xf32>
      %23 = vector.extract_strided_slice %21 {offsets = [0, 128], sizes = [8, 128], strides = [1, 1]} : vector<8x512xf32> to vector<8x128xf32>
      %24 = arith.addf %22, %23 : vector<8x128xf32>
      %25 = vector.extract_strided_slice %21 {offsets = [0, 256], sizes = [8, 128], strides = [1, 1]} : vector<8x512xf32> to vector<8x128xf32>
      %26 = arith.addf %24, %25 : vector<8x128xf32>
      %27 = vector.extract_strided_slice %21 {offsets = [0, 384], sizes = [8, 128], strides = [1, 1]} : vector<8x512xf32> to vector<8x128xf32>
      %28 = arith.addf %26, %27 : vector<8x128xf32>
      %29 = vector.shape_cast %28 : vector<8x128xf32> to vector<1x8x128xf32>
      %c0_9 = arith.constant 0 : index
      %c0_10 = arith.constant 0 : index
      %c0_11 = arith.constant 0 : index
      %30 = vector.load %arg3[%c0_9, %c0_10, %c0_11] : memref<1x8x128xf32, #tpu.memory_space<vmem>>, vector<1x8x128xf32>
      tpu.vector_store %arg3[%c0_9, %c0_10, %c0_11], %29 {strides = array<i32>} : memref<1x8x128xf32, #tpu.memory_space<vmem>>, vector<1x8x128xf32>,
    } else {
    }
    %c0_i32_1 = arith.constant 0 : i32
    %3 = arith.cmpi eq, %arg0, %c0_i32_1 : i32
    %4 = arith.extui %3 : i1 to i32
    %c0_i32_2 = arith.constant 0 : i32
    %5 = arith.cmpi ne, %4, %c0_i32_2 : i32
    scf.if %5 {
      %cst = arith.constant 0.000000e+00 : f32
      %6 = vector.broadcast %cst : f32 to vector<8x512xf32>
      %c0 = arith.constant 0 : index
      %c0_3 = arith.constant 0 : index
      %7 = vector.load %arg1[%c0, %c0_3] : memref<8x512xf32, #tpu.memory_space<vmem>>, vector<8x512xf32>
      %c0_4 = arith.constant 0 : index
      %c0_5 = arith.constant 0 : index
      %8 = vector.load %arg2[%c0_4, %c0_5] : memref<8x512xf32, #tpu.memory_space<vmem>>, vector<8x512xf32>
      %cst_6 = arith.constant 0.000000e+00 : f32
      %9 = vector.broadcast %cst_6 : f32 to vector<8x512xf32>
      %10 = arith.maximumf %7, %9 : vector<8x512xf32>
      %11 = arith.mulf %7, %8 : vector<8x512xf32>
      %12 = arith.subf %10, %11 : vector<8x512xf32>
      %13 = math.absf %7 : vector<8x512xf32>
      %cst_7 = arith.constant 0.000000e+00 : f32
      %14 = vector.broadcast %cst_7 : f32 to vector<8x512xf32>
      %15 = arith.subf %14, %13 : vector<8x512xf32>
      %16 = math.exp %15 : vector<8x512xf32>
      %cst_8 = arith.constant 1.000000e+00 : f32
      %17 = vector.broadcast %cst_8 : f32 to vector<8x512xf32>
      %18 = arith.addf %17, %16 : vector<8x512xf32>
      %19 = math.log %18 : vector<8x512xf32>
      %20 = arith.addf %12, %19 : vector<8x512xf32>
      %21 = tpu.iota {dimensions = array<i32: 0>} : vector<8x512xi32>
      %22 = tpu.iota {dimensions = array<i32: 1>} : vector<8x512xi32>
      %c0_i32_9 = arith.constant 0 : i32
      %23 = vector.broadcast %c0_i32_9 : i32 to vector<8x512xi32>
      %24 = arith.addi %23, %21 : vector<8x512xi32>
      %c512_i32 = arith.constant 512 : i32
      %25 = vector.broadcast %c512_i32 : i32 to vector<8x512xi32>
      %26 = arith.muli %24, %25 : vector<8x512xi32>
      %27 = arith.addi %26, %22 : vector<8x512xi32>
      %c2048_i32 = arith.constant 2048 : i32
      %28 = vector.broadcast %c2048_i32 : i32 to vector<8x512xi32>
      %29 = arith.cmpi slt, %27, %28 : vector<8x512xi32>
      %cst_10 = arith.constant 0.000000e+00 : f32
      %30 = vector.broadcast %cst_10 : f32 to vector<8x512xf32>
      %31 = arith.select %29, %20, %30 : vector<8x512xi1>, vector<8x512xf32>
      %32 = arith.addf %6, %31 : vector<8x512xf32>
      %33 = vector.extract_strided_slice %32 {offsets = [0, 0], sizes = [8, 128], strides = [1, 1]} : vector<8x512xf32> to vector<8x128xf32>
      %34 = vector.extract_strided_slice %32 {offsets = [0, 128], sizes = [8, 128], strides = [1, 1]} : vector<8x512xf32> to vector<8x128xf32>
      %35 = arith.addf %33, %34 : vector<8x128xf32>
      %36 = vector.extract_strided_slice %32 {offsets = [0, 256], sizes = [8, 128], strides = [1, 1]} : vector<8x512xf32> to vector<8x128xf32>
      %37 = arith.addf %35, %36 : vector<8x128xf32>
      %38 = vector.extract_strided_slice %32 {offsets = [0, 384], sizes = [8, 128], strides = [1, 1]} : vector<8x512xf32> to vector<8x128xf32>
      %39 = arith.addf %37, %38 : vector<8x128xf32>
      %40 = vector.shape_cast %39 : vector<8x128xf32> to vector<1x8x128xf32>
      %c0_11 = arith.constant 0 : index
      %c0_12 = arith.constant 0 : index
      %c0_13 = arith.constant 0 : index
      %41 = vector.load %arg3[%c0_11, %c0_12, %c0_13] : memref<1x8x128xf32, #tpu.memory_space<vmem>>, vector<1x8x128xf32>
      tpu.vector_store %arg3[%c0_11, %c0_12, %c0_13], %40 {strides = array<i32>} : memref<1x8x128xf32, #tpu.memory_space<vmem>>, vector<1x8x128xf32>,
    } else {
    }
    return
  }
  func.func @transform_0(%arg0: i32) -> (i32, i32) {
    %c0_i32 = arith.constant 0 : i32
    %c0_i32_0 = arith.constant 0 : i32
    return %arg0, %c0_i32 : i32, i32
  }
  func.func @transform_1(%arg0: i32) -> (i32, i32) {
    %c0_i32 = arith.constant 0 : i32
    %c0_i32_0 = arith.constant 0 : i32
    return %arg0, %c0_i32 : i32, i32
  }
  func.func @transform_2(%arg0: i32) -> (i32, i32, i32) {
    %c0_i32 = arith.constant 0 : i32
    %c0_i32_0 = arith.constant 0 : i32
    %c0_i32_1 = arith.constant 0 : i32
    return %arg0, %c0_i32, %c0_i32_0 : i32, i32, i32
  }
}

</mosaic_0001>

<llo_original>
// kernel: tpu_custom_call.1
$region0: #{tpu_custom_call.1}
  #allocation0 [shape = 'u32[]', space=smem, size = 0x4, offset = 0x4, fixed_abs, tag = 'smem constant byte address 0x4 - core index']
  #allocation1 [shape = 'u32[144,128]{1,0:T(1,128)}', space=vmem, size = 0x12000, scoped, tag = 'internal scratch']
  %s0 = inlined_call_operand.hbm [shape: f32[4,512], index: 0, kind: input, shape index: {}]
  %s1 = inlined_call_operand.hbm [shape: f32[4,512], index: 1, kind: input, shape index: {}]
  %s2 = inlined_call_operand.hbm [shape: f32[1,8,128], index: 2, kind: output, shape index: {}]
  %s3 = sld [smem:[#allocation0]]
  $region34: #{tpu_custom_call.1} parent=0
    _
  %s5 = ssub.s32 1, %s3
  %s6 = scalar_select 0, %s5, %s3
  $region1: #{tpu_custom_call.1} parent=0
    #allocation2 [shape = 'u8[16384]{0}', space=vmem, size = 0x4000, scoped, tag = 'input window, operand 0, single buffered']
    #allocation3 [shape = 's32[1]{0}', space=sflag, size = 0x4, scoped, tag = 'scoped memory for tpu_custom_call.1']
    #allocation4 [shape = 's32[1]{0}', space=sflag, size = 0x4, scoped, tag = 'scoped memory for tpu_custom_call.1']
    #allocation5 [shape = 'u8[16384]{0}', space=vmem, size = 0x4000, scoped, tag = 'input window, operand 1, single buffered']
    #allocation6 [shape = 's32[1]{0}', space=sflag, size = 0x4, scoped, tag = 'scoped memory for tpu_custom_call.1']
    #allocation7 [shape = 'u8[4096]{0}', space=vmem, size = 0x1000, scoped, tag = 'output window, operand 0, single buffered']
    %7 = vsyncpa [#allocation3], 0
    %8 = vsyncpa [#allocation6], 0
    %9 = vsyncpa [#allocation4], 0
    // Predicated region
    $region2: #{tpu_custom_call.1} parent=1 // pred_check
      _
    $region3: #{tpu_custom_call.1} parent=1 // pred_check_branch
      %11 = sbr.rel (0) target = $region5
    $region4: #{tpu_custom_call.1} parent=1 // pred_region
      %s13 = ssub.s32 512, 256
      %14 = vsyncadd [#allocation3], %s13
      %s15 = sshll.u32 [#allocation2], 4
      %s16 = int_to_ptr.vmem [resolvable:$true] %s15
      %21 = dma.hbm_to_vmem [thread:$0]  %s0, 256, %s16, [#allocation3], 256, 256, 16
    $region5: #{tpu_custom_call.1} parent=1 // pred_fallthru
      _
    // Predicated region
    $region6: #{tpu_custom_call.1} parent=1 // pred_check
      _
    $region7: #{tpu_custom_call.1} parent=1 // pred_check_branch
      %23 = sbr.rel (0) target = $region9
    $region8: #{tpu_custom_call.1} parent=1 // pred_region
      %s25 = ssub.s32 512, 256
      %26 = vsyncadd [#allocation6], %s25
      %s27 = sshll.u32 [#allocation5], 4
      %s28 = int_to_ptr.vmem [resolvable:$true] %s27
      %33 = dma.hbm_to_vmem [thread:$0]  %s1, 256, %s28, [#allocation6], 256, 256, 16
    $region9: #{tpu_custom_call.1} parent=1 // pred_fallthru
      _
    // Predicated region
    $region10: #{tpu_custom_call.1} parent=1 // pred_check
      _
    $region11: #{tpu_custom_call.1} parent=1 // pred_check_branch
      %35 = sbr.rel (0) target = $region13
    $region12: #{tpu_custom_call.1} parent=1 // pred_region
      %36 = dma.done [#allocation3], 512
    $region13: #{tpu_custom_call.1} parent=1 // pred_fallthru
      _
    // Predicated region
    $region14: #{tpu_custom_call.1} parent=1 // pred_check
      _
    $region15: #{tpu_custom_call.1} parent=1 // pred_check_branch
      %38 = sbr.rel (0) target = $region17
    $region16: #{tpu_custom_call.1} parent=1 // pred_region
      %39 = dma.done [#allocation6], 512
    $region17: #{tpu_custom_call.1} parent=1 // pred_fallthru
      _
    %p40 = scmp.ne.s32.totalorder 0, 0
    // Predicated region
    $region18: #{tpu_custom_call.1} parent=1 // pred_check
      %p41 = pneg %p40
    $region19: #{tpu_custom_call.1} parent=1 // pred_check_branch
      %43 = sbr.rel (%p41) target = $region21
    $region20: #{tpu_custom_call.1} parent=1 // pred_region
      %v44 = vld [vmem:[#allocation2] sm:$0xff]
      %v45 = vld [vmem:[#allocation2 + $0x8] sm:$0xff]
      %v46 = vld [vmem:[#allocation2 + $0x10] sm:$0xff]
      %v47 = vld [vmem:[#allocation2 + $0x18] sm:$0xff]
      %v48 = vld [vmem:[#allocation5] sm:$0xff]
      %v49 = vld [vmem:[#allocation5 + $0x8] sm:$0xff]
      %v50 = vld [vmem:[#allocation5 + $0x10] sm:$0xff]
      %v51 = vld [vmem:[#allocation5 + $0x18] sm:$0xff]
      %v52 = vmax.f32 %v44, 0.0
      %v53 = vmax.f32 %v45, 0.0
      %v54 = vmax.f32 %v46, 0.0
      %v55 = vmax.f32 %v47, 0.0
      %v56 = vmul.f32 %v44, %v48
      %v57 = vmul.f32 %v45, %v49
      %v58 = vmul.f32 %v46, %v50
      %v59 = vmul.f32 %v47, %v51
      %v60 = vsub.f32 %v52, %v56
      %v61 = vsub.f32 %v53, %v57
      %v62 = vsub.f32 %v54, %v58
      %v63 = vsub.f32 %v55, %v59
      %v64 = vand.u32 2147483647, %v44
      %v65 = vand.u32 2147483647, %v45
      %v66 = vand.u32 2147483647, %v46
      %v67 = vand.u32 2147483647, %v47
      %v68 = vsub.f32 0.0, %v64
      %v69 = vsub.f32 0.0, %v65
      %v70 = vsub.f32 0.0, %v66
      %v71 = vsub.f32 0.0, %v67
      %v72 = vmul.f32 %v68, 1.442695
      %v73 = vpow.pop %v72
      %v74 = vmul.f32 %v69, 1.442695
      %v75 = vpow.pop %v74
      %v76 = vmul.f32 %v70, 1.442695
      %v77 = vpow.pop %v76
      %v78 = vmul.f32 %v71, 1.442695
      %v79 = vpow.pop %v78
      %v80 = vadd.f32 %v73, 1.0
      %v81 = vadd.f32 %v75, 1.0
      %v82 = vadd.f32 %v77, 1.0
      %v83 = vadd.f32 %v79, 1.0
      %v84 = vlog2.pop %v80
      %v85 = vmul.f32 %v84, 0.6931472
      %v86 = vlog2.pop %v81
      %v87 = vmul.f32 %v86, 0.6931472
      %v88 = vlog2.pop %v82
      %v89 = vmul.f32 %v88, 0.6931472
      %v90 = vlog2.pop %v83
      %v91 = vmul.f32 %v90, 0.6931472
      %v92 = vadd.f32 %v60, %v85
      %v93 = vadd.f32 %v61, %v87
      %v94 = vadd.f32 %v62, %v89
      %v95 = vadd.f32 %v63, %v91
      %v96 = vadd.f32 %v92, 0.0
      %v97 = vadd.f32 %v93, 0.0
      %v98 = vadd.f32 %v94, 0.0
      %v99 = vadd.f32 %v95, 0.0
      %v102 = vrot.slane %v96, 4
      %v103 = vrot.slane %v98, 4
      %v106 = vadd.f32 %v96, %v102
      %v107 = vadd.f32 %v98, %v103
      %v108 = vadd.f32 %v106, %v97
      %v109 = vadd.f32 %v107, %v99
      %v112 = vrot.slane %v97, 4
      %v113 = vrot.slane %v99, 4
      %v116 = vadd.f32 %v108, %v112
      %v117 = vadd.f32 %v109, %v113
      %v120 = vcombine.low %v116, %v117
      %122 = vst [vmem:[#allocation7] sm:$0xff] %v120
    $region21: #{tpu_custom_call.1} parent=1 // pred_fallthru
      _
    %p123 = scmp.eq.s32.totalorder 0, 0
    // Predicated region
    $region22: #{tpu_custom_call.1} parent=1 // pred_check
      %p124 = pneg %p123
    $region23: #{tpu_custom_call.1} parent=1 // pred_check_branch
      %126 = sbr.rel (%p124) target = $region25
    $region24: #{tpu_custom_call.1} parent=1 // pred_region
      %v127 = vld [vmem:[#allocation2] sm:$0xff]
      %v128 = vld [vmem:[#allocation2 + $0x8] sm:$0xff]
      %v129 = vld [vmem:[#allocation2 + $0x10] sm:$0xff]
      %v130 = vld [vmem:[#allocation2 + $0x18] sm:$0xff]
      %v131 = vld [vmem:[#allocation5] sm:$0xff]
      %v132 = vld [vmem:[#allocation5 + $0x8] sm:$0xff]
      %v133 = vld [vmem:[#allocation5 + $0x10] sm:$0xff]
      %v134 = vld [vmem:[#allocation5 + $0x18] sm:$0xff]
      %v135 = vmax.f32 %v127, 0.0
      %v136 = vmax.f32 %v128, 0.0
      %v137 = vmax.f32 %v129, 0.0
      %v138 = vmax.f32 %v130, 0.0
      %v139 = vmul.f32 %v127, %v131
      %v140 = vmul.f32 %v128, %v132
      %v141 = vmul.f32 %v129, %v133
      %v142 = vmul.f32 %v130, %v134
      %v143 = vsub.f32 %v135, %v139
      %v144 = vsub.f32 %v136, %v140
      %v145 = vsub.f32 %v137, %v141
      %v146 = vsub.f32 %v138, %v142
      %v147 = vand.u32 2147483647, %v127
      %v148 = vand.u32 2147483647, %v128
      %v149 = vand.u32 2147483647, %v129
      %v150 = vand.u32 2147483647, %v130
      %v151 = vsub.f32 0.0, %v147
      %v152 = vsub.f32 0.0, %v148
      %v153 = vsub.f32 0.0, %v149
      %v154 = vsub.f32 0.0, %v150
      %v155 = vmul.f32 %v151, 1.442695
      %v156 = vpow.pop %v155
      %v157 = vmul.f32 %v152, 1.442695
      %v158 = vpow.pop %v157
      %v159 = vmul.f32 %v153, 1.442695
      %v160 = vpow.pop %v159
      %v161 = vmul.f32 %v154, 1.442695
      %v162 = vpow.pop %v161
      %v163 = vadd.f32 %v156, 1.0
      %v164 = vadd.f32 %v158, 1.0
      %v165 = vadd.f32 %v160, 1.0
      %v166 = vadd.f32 %v162, 1.0
      %v167 = vlog2.pop %v163
      %v168 = vmul.f32 %v167, 0.6931472
      %v169 = vlog2.pop %v164
      %v170 = vmul.f32 %v169, 0.6931472
      %v171 = vlog2.pop %v165
      %v172 = vmul.f32 %v171, 0.6931472
      %v173 = vlog2.pop %v166
      %v174 = vmul.f32 %v173, 0.6931472
      %v175 = vadd.f32 %v143, %v168
      %v176 = vadd.f32 %v144, %v170
      %v177 = vadd.f32 %v145, %v172
      %v178 = vadd.f32 %v146, %v174
      %v179 = vlaneseq
      %v180 = vshrl.u32 %v179, 7
      %v181 = vlaneseq
      %v182 = vand.u32 %v181, 127
      %v183 = vadd.s32 %v182, 128
      %v184 = vadd.s32 %v182, 256
      %v185 = vadd.s32 %v182, 384
      %v186 = vmul.u32 %v180, 512
      %v187 = vadd.s32 %v186, %v182
      %v188 = vadd.s32 %v186, %v183
      %v189 = vadd.s32 %v186, %v184
      %v190 = vadd.s32 %v186, %v185
      %vm191 = vcmp.lt.s32.totalorder %v187, 2048
      %vm192 = vcmp.lt.s32.totalorder %v188, 2048
      %vm193 = vcmp.lt.s32.totalorder %v189, 2048
      %vm194 = vcmp.lt.s32.totalorder %v190, 2048
      %v199 = vcombine.low %v175, %v177
      %v200 = vcombine.high %v175, %v177
      %v201 = vcombine.low %v176, %v178
      %v202 = vcombine.high %v176, %v178
      %v207 = vsel %vm191, %v199, 0.0
      %v208 = vsel %vm192, %v200, 0.0
      %v209 = vsel %vm193, %v201, 0.0
      %v210 = vsel %vm194, %v202, 0.0
      %v211 = vadd.f32 %v207, 0.0
      %v212 = vadd.f32 %v208, 0.0
      %v213 = vadd.f32 %v209, 0.0
      %v214 = vadd.f32 %v210, 0.0
      %v215 = vadd.f32 %v211, %v212
      %v216 = vadd.f32 %v215, %v213
      %v217 = vadd.f32 %v216, %v214
      %218 = vst [vmem:[#allocation7] sm:$0xff] %v217
    $region25: #{tpu_custom_call.1} parent=1 // pred_fallthru
      _
    // Predicated region
    $region26: #{tpu_custom_call.1} parent=1 // pred_check
      _
    $region27: #{tpu_custom_call.1} parent=1 // pred_check_branch
      %220 = sbr.rel (0) target = $region29
    $region28: #{tpu_custom_call.1} parent=1 // pred_region
      %s222 = ssub.s32 128, 128
      %223 = vsyncadd [#allocation4], %s222
      %s225 = sshll.u32 [#allocation7], 4
      %s226 = int_to_ptr.vmem [resolvable:$true] %s225
      %228 = dma.vmem_to_hbm [thread:$0]  %s226, 128, %s2, [#allocation4]
    $region29: #{tpu_custom_call.1} parent=1 // pred_fallthru
      _
    // Predicated region
    $region30: #{tpu_custom_call.1} parent=1 // pred_check
      _
    $region31: #{tpu_custom_call.1} parent=1 // pred_check_branch
      %230 = sbr.rel (0) target = $region33
    $region32: #{tpu_custom_call.1} parent=1 // pred_region
      %231 = dma.done [#allocation4], 128
    $region33: #{tpu_custom_call.1} parent=1 // pred_fallthru
      _
    %232 = vsyncpa [#allocation3], 1
    %233 = vsyncpa [#allocation6], 1
    %234 = vsyncpa [#allocation4], 1

</llo_original>
